<compile_context>
chip_gen: v7x
topology: tpu7x:2x2x1
jax: 0.10.0
libtpu: 0.0.40
codegen_flags: <defaults>
</compile_context>

<pallas_src>
import functools

import jax
import jax.numpy as jnp
from jax.experimental import pallas as pl
from jax.experimental.pallas import tpu as pltpu


def mlp_kernel(x_ref, w1_ref, b1_ref, w2_ref, b2_ref, w3_ref, b3_ref, o_ref):
    # Cast activations to bf16 inside the kernel (x is streamed as f32).
    x = x_ref[...].astype(jnp.bfloat16)
    # fc1 + relu  (bf16 MXU matmul, f32 accumulate)
    h1 = jnp.dot(x, w1_ref[...], preferred_element_type=jnp.float32)
    h1 = jnp.maximum(h1 + b1_ref[...], 0.0)
    # dropout1: identity (eval mode)
    # fc2 + relu
    h2 = jnp.dot(h1.astype(jnp.bfloat16), w2_ref[...],
                 preferred_element_type=jnp.float32)
    h2 = jnp.maximum(h2 + b2_ref[...], 0.0)
    # dropout2: identity (eval mode)
    # fc3 (logits, lane-padded to 128 columns; no activation); bf16 store.
    out = jnp.dot(h2.astype(jnp.bfloat16), w3_ref[...],
                  preferred_element_type=jnp.float32)
    o_ref[...] = (out + b3_ref[...]).astype(o_ref.dtype)


def _round_up(n, m):
    return ((n + m - 1) // m) * m


@functools.partial(jax.jit, static_argnames=("tile_b",))
def mlp_forward(x, params, *, tile_b=1024):
    w1, b1, w2, b2, w3, b3 = params
    B, F = x.shape
    num_classes = w3.shape[1]
    LANES = 128
    SUB = 16  # sublane packing granularity (bf16 output tiles)

    # Lane-pad fc3 to 128 output columns (zeros): unmasked vst + clean MXU N.
    w3p = jnp.zeros((w3.shape[0], LANES), w3.dtype).at[:, :num_classes].set(w3)
    b3p = jnp.zeros((1, LANES), b3.dtype).at[:, :num_classes].set(b3)

    # bf16 weights (tiny, VMEM-resident), f32 biases; x stays f32 — it is cast
    # to bf16 inside the kernel to avoid an extra wrapper-side HBM pass.
    w1b = w1.astype(jnp.bfloat16)
    w2b = w2.astype(jnp.bfloat16)
    w3b = w3p.astype(jnp.bfloat16)

    # Batch tile: as large as tile_b, but keep >= 2 grid steps when B is large
    # enough so v7x's two TensorCores both get work (grid axis is "parallel").
    if B <= SUB:
        TB = SUB
    elif B <= 2 * SUB:
        TB = _round_up(B, SUB)
    else:
        half = _round_up(pl.cdiv(B, 2), SUB)
        TB = min(tile_b, half)

    # Pad only the ragged tail of the batch (no-op when B % TB == 0).
    B_pad = _round_up(B, TB)
    xb = x
    if B_pad != B:
        xb = jnp.zeros((B_pad, F), x.dtype).at[:B].set(x)

    resident = lambda a: pl.BlockSpec(a.shape, lambda i: (0,) * a.ndim)

    out_pad = pl.pallas_call(
        mlp_kernel,
        out_shape=jax.ShapeDtypeStruct((B_pad, LANES), jnp.bfloat16),
        grid=(B_pad // TB,),
        in_specs=[
            pl.BlockSpec((TB, F), lambda i: (i, 0)),   # x: streamed over batch
            resident(w1b), resident(b1),               # weights/biases pinned
            resident(w2b), resident(b2),
            resident(w3b), resident(b3p),
        ],
        out_specs=pl.BlockSpec((TB, LANES), lambda i: (i, 0)),
        compiler_params=pltpu.CompilerParams(
            dimension_semantics=("parallel",),
        ),
    )(xb, w1b, b1, w2b, b2, w3b, b3p)

    # Tiny post-slice: (B, num_classes) back to f32 to match the module's dtype.
    return out_pad[:B, :num_classes].astype(jnp.float32)


def init_params(key, input_size, num_classes):
    """Deterministic init mimicking PyTorch nn.Linear default (U(-1/sqrt(fan_in), +)).

    Weights stored as (in_features, out_features): transpose of PyTorch's
    (out, in), so the kernel computes x @ W + b.
    """
    def linear(key, fan_in, fan_out):
        kw, kb = jax.random.split(key)
        bound = 1.0 / jnp.sqrt(fan_in)
        w = jax.random.uniform(kw, (fan_in, fan_out), jnp.float32, -bound, bound)
        b = jax.random.uniform(kb, (1, fan_out), jnp.float32, -bound, bound)
        return w, b

    k1, k2, k3 = jax.random.split(key, 3)
    w1, b1 = linear(k1, input_size, 256)
    w2, b2 = linear(k2, 256, 128)
    w3, b3 = linear(k3, 128, num_classes)
    return (w1, b1, w2, b2, w3, b3)


def ref_forward(x, params):
    """Plain-JAX reference mirroring the kernel's bf16-input / f32-accumulate math.

    Note: logits differ from a pure-f32 PyTorch reference at ~1e-2 level due to
    bf16 activations/weights and the bf16 output store.
    """
    w1, b1, w2, b2, w3, b3 = params
    xb = x.astype(jnp.bfloat16)
    w1b, w2b, w3b = (w.astype(jnp.bfloat16) for w in (w1, w2, w3))
    h1 = jnp.maximum(
        jnp.dot(xb, w1b, preferred_element_type=jnp.float32) + b1, 0.0)
    h2 = jnp.maximum(
        jnp.dot(h1.astype(jnp.bfloat16), w2b,
                preferred_element_type=jnp.float32) + b2, 0.0)
    out = jnp.dot(h2.astype(jnp.bfloat16), w3b,
                  preferred_element_type=jnp.float32) + b3
    return out.astype(jnp.bfloat16).astype(jnp.float32)


if __name__ == "__main__":
    key = jax.random.PRNGKey(0)
    input_size = 128          # SelectKBest(k=128)
    num_classes = 10          # synthetic label count
    batch = 200               # non-multiple of tile -> exercises padding + 2 grid steps

    k_x, k_p = jax.random.split(key)
    x = jax.random.normal(k_x, (batch, input_size), jnp.float32)
    params = init_params(k_p, input_size, num_classes)

    out = mlp_forward(x, params)
    out = jax.block_until_ready(out)

    ref = ref_forward(x, params)
    assert out.shape == (batch, num_classes), out.shape
    assert jnp.allclose(out, ref, atol=3e-2, rtol=3e-2), (
        float(jnp.max(jnp.abs(out - ref))))

    print("KERNEL_OK")
</pallas_src>

<mosaic_0001>
module attributes {stable_mosaic.version = 11 : i64} {
  func.func @mlp_kernel(%arg0: i32, %arg1: memref<112x128xf32, #tpu.memory_space<vmem>>, %arg2: memref<128x256xbf16, #tpu.memory_space<vmem>>, %arg3: memref<1x256xf32, #tpu.memory_space<vmem>>, %arg4: memref<256x128xbf16, #tpu.memory_space<vmem>>, %arg5: memref<1x128xf32, #tpu.memory_space<vmem>>, %arg6: memref<128x128xbf16, #tpu.memory_space<vmem>>, %arg7: memref<1x128xf32, #tpu.memory_space<vmem>>, %arg8: memref<112x128xbf16, #tpu.memory_space<vmem>>) attributes {dimension_semantics = [#tpu.dimension_semantics<parallel>], iteration_bounds = array<i64: 2>, scalar_prefetch = 0 : i64, scratch_operands = 0 : i64, tpu.core_type = #tpu.core_type<tc>, window_params = [{transform_indices = @transform_0, window_bounds = array<i64: 112, 128>}, {pipeline_mode = #tpu.pipeline_mode<synchronous>, transform_indices = @transform_1, window_bounds = array<i64: 128, 256>}, {pipeline_mode = #tpu.pipeline_mode<synchronous>, transform_indices = @transform_2, window_bounds = array<i64: 1, 256>}, {pipeline_mode = #tpu.pipeline_mode<synchronous>, transform_indices = @transform_3, window_bounds = array<i64: 256, 128>}, {pipeline_mode = #tpu.pipeline_mode<synchronous>, transform_indices = @transform_4, window_bounds = array<i64: 1, 128>}, {pipeline_mode = #tpu.pipeline_mode<synchronous>, transform_indices = @transform_5, window_bounds = array<i64: 128, 128>}, {pipeline_mode = #tpu.pipeline_mode<synchronous>, transform_indices = @transform_6, window_bounds = array<i64: 1, 128>}, {transform_indices = @transform_7, window_bounds = array<i64: 112, 128>}]} {
    %c0 = arith.constant 0 : index
    %c0_0 = arith.constant 0 : index
    %0 = vector.load %arg1[%c0, %c0_0] : memref<112x128xf32, #tpu.memory_space<vmem>>, vector<112x128xf32>
    %1 = arith.truncf %0 : vector<112x128xf32> to vector<112x128xbf16>
    %c0_1 = arith.constant 0 : index
    %c0_2 = arith.constant 0 : index
    %2 = vector.load %arg2[%c0_1, %c0_2] : memref<128x256xbf16, #tpu.memory_space<vmem>>, vector<128x256xbf16>
    %cst = arith.constant dense<0.000000e+00> : vector<112x256xf32>
    %3 = tpu.matmul %1, %2, %cst {dimension_numbers = #tpu.dot_dimension_numbers<[1], [0], [0], [1], [0, 0, 1, 1], [], []>} : vector<112x128xbf16>, vector<128x256xbf16>, vector<112x256xf32> -> vector<112x256xf32>
    %c0_3 = arith.constant 0 : index
    %c0_4 = arith.constant 0 : index
    %4 = vector.load %arg3[%c0_3, %c0_4] : memref<1x256xf32, #tpu.memory_space<vmem>>, vector<1x256xf32>
    %5 = vector.broadcast %4 : vector<1x256xf32> to vector<112x256xf32>
    %6 = arith.addf %3, %5 : vector<112x256xf32>
    %cst_5 = arith.constant 0.000000e+00 : f32
    %7 = vector.broadcast %cst_5 : f32 to vector<112x256xf32>
    %8 = arith.maximumf %6, %7 : vector<112x256xf32>
    %9 = arith.truncf %8 : vector<112x256xf32> to vector<112x256xbf16>
    %c0_6 = arith.constant 0 : index
    %c0_7 = arith.constant 0 : index
    %10 = vector.load %arg4[%c0_6, %c0_7] : memref<256x128xbf16, #tpu.memory_space<vmem>>, vector<256x128xbf16>
    %cst_8 = arith.constant dense<0.000000e+00> : vector<112x128xf32>
    %11 = tpu.matmul %9, %10, %cst_8 {dimension_numbers = #tpu.dot_dimension_numbers<[1], [0], [0], [1], [0, 0, 1, 1], [], []>} : vector<112x256xbf16>, vector<256x128xbf16>, vector<112x128xf32> -> vector<112x128xf32>
    %c0_9 = arith.constant 0 : index
    %c0_10 = arith.constant 0 : index
    %12 = vector.load %arg5[%c0_9, %c0_10] : memref<1x128xf32, #tpu.memory_space<vmem>>, vector<1x128xf32>
    %13 = vector.broadcast %12 : vector<1x128xf32> to vector<112x128xf32>
    %14 = arith.addf %11, %13 : vector<112x128xf32>
    %cst_11 = arith.constant 0.000000e+00 : f32
    %15 = vector.broadcast %cst_11 : f32 to vector<112x128xf32>
    %16 = arith.maximumf %14, %15 : vector<112x128xf32>
    %17 = arith.truncf %16 : vector<112x128xf32> to vector<112x128xbf16>
    %c0_12 = arith.constant 0 : index
    %c0_13 = arith.constant 0 : index
    %18 = vector.load %arg6[%c0_12, %c0_13] : memref<128x128xbf16, #tpu.memory_space<vmem>>, vector<128x128xbf16>
    %cst_14 = arith.constant dense<0.000000e+00> : vector<112x128xf32>
    %19 = tpu.matmul %17, %18, %cst_14 {dimension_numbers = #tpu.dot_dimension_numbers<[1], [0], [0], [1], [0, 0, 1, 1], [], []>} : vector<112x128xbf16>, vector<128x128xbf16>, vector<112x128xf32> -> vector<112x128xf32>
    %c0_15 = arith.constant 0 : index
    %c0_16 = arith.constant 0 : index
    %20 = vector.load %arg7[%c0_15, %c0_16] : memref<1x128xf32, #tpu.memory_space<vmem>>, vector<1x128xf32>
    %21 = vector.broadcast %20 : vector<1x128xf32> to vector<112x128xf32>
    %22 = arith.addf %19, %21 : vector<112x128xf32>
    %23 = arith.truncf %22 : vector<112x128xf32> to vector<112x128xbf16>
    %c0_17 = arith.constant 0 : index
    %c0_18 = arith.constant 0 : index
    %24 = vector.load %arg8[%c0_17, %c0_18] : memref<112x128xbf16, #tpu.memory_space<vmem>>, vector<112x128xbf16>
    tpu.vector_store %arg8[%c0_17, %c0_18], %23 {strides = array<i32>} : memref<112x128xbf16, #tpu.memory_space<vmem>>, vector<112x128xbf16>,
    return
  }
  func.func @transform_0(%arg0: i32) -> (i32, i32) {
    %c0_i32 = arith.constant 0 : i32
    %c0_i32_0 = arith.constant 0 : i32
    return %arg0, %c0_i32 : i32, i32
  }
  func.func @transform_1(%arg0: i32) -> (i32, i32) {
    %c0_i32 = arith.constant 0 : i32
    %c0_i32_0 = arith.constant 0 : i32
    %c0_i32_1 = arith.constant 0 : i32
    return %c0_i32, %c0_i32_0 : i32, i32
  }
  func.func @transform_2(%arg0: i32) -> (i32, i32) {
    %c0_i32 = arith.constant 0 : i32
    %c0_i32_0 = arith.constant 0 : i32
    %c0_i32_1 = arith.constant 0 : i32
    return %c0_i32, %c0_i32_0 : i32, i32
  }
  func.func @transform_3(%arg0: i32) -> (i32, i32) {
    %c0_i32 = arith.constant 0 : i32
    %c0_i32_0 = arith.constant 0 : i32
    %c0_i32_1 = arith.constant 0 : i32
    return %c0_i32, %c0_i32_0 : i32, i32
  }
  func.func @transform_4(%arg0: i32) -> (i32, i32) {
    %c0_i32 = arith.constant 0 : i32
    %c0_i32_0 = arith.constant 0 : i32
    %c0_i32_1 = arith.constant 0 : i32
    return %c0_i32, %c0_i32_0 : i32, i32
  }
  func.func @transform_5(%arg0: i32) -> (i32, i32) {
    %c0_i32 = arith.constant 0 : i32
    %c0_i32_0 = arith.constant 0 : i32
    %c0_i32_1 = arith.constant 0 : i32
    return %c0_i32, %c0_i32_0 : i32, i32
  }
  func.func @transform_6(%arg0: i32) -> (i32, i32) {
    %c0_i32 = arith.constant 0 : i32
    %c0_i32_0 = arith.constant 0 : i32
    %c0_i32_1 = arith.constant 0 : i32
    return %c0_i32, %c0_i32_0 : i32, i32
  }
  func.func @transform_7(%arg0: i32) -> (i32, i32) {
    %c0_i32 = arith.constant 0 : i32
    %c0_i32_0 = arith.constant 0 : i32
    return %arg0, %c0_i32 : i32, i32
  }
}

</mosaic_0001>

<llo_original>
// kernel: mlp_forward.1
$region0: #{mlp_forward.1}
  #allocation0 [shape = 'u32[]', space=smem, size = 0x4, offset = 0x4, fixed_abs, tag = 'smem constant byte address 0x4 - core index']
  #allocation1 [shape = 'u32[144,128]{1,0:T(1,128)}', space=vmem, size = 0x12000, scoped, tag = 'internal scratch']
  %s0 = inlined_call_operand.vmem [shape: f32[224,128], index: 0, kind: input, shape index: {}]
  %s1 = inlined_call_operand.vmem [shape: bf16[128,256], index: 1, kind: input, shape index: {}]
  %s2 = inlined_call_operand.vmem [shape: f32[1,256], index: 2, kind: input, shape index: {}]
  %s3 = inlined_call_operand.vmem [shape: bf16[256,128], index: 3, kind: input, shape index: {}]
  %s4 = inlined_call_operand.vmem [shape: f32[1,128], index: 4, kind: input, shape index: {}]
  %s5 = inlined_call_operand.vmem [shape: bf16[128,128], index: 5, kind: input, shape index: {}]
  %s6 = inlined_call_operand.vmem [shape: f32[1,128], index: 6, kind: input, shape index: {}]
  %s7 = inlined_call_operand.vmem [shape: bf16[224,128], index: 7, kind: output, shape index: {}]
  %s8 = sld [smem:[#allocation0]]
  $region61: #{mlp_forward.1} parent=0
    _
  %s10 = ssub.s32 1, %s8
  %s11 = scalar_select 0, %s10, %s8
  loop: start=0, step=1, limit=4
  $region2: #{mlp_forward.1} parent=0 // loop_pre_header
    _
  $region3: #{mlp_forward.1} parent=0 // loop_header
    %s13 = sphi 0, %s17
    %p14 = scmp.ge.s32.totalorder %s13, 4
    %s23 = sphi 0, %s25
    %s26 = sphi 0, %s23
    %s27 = sphi 0, %s26
    %s43 = sphi 0, %s27
    %s47 = sphi 0, %s47
    %s49 = sphi 0, %s47
    %s50 = sphi 0, %s49
    %s64 = sphi 0, %s50
    %s68 = sphi 0, %s68
    %s70 = sphi 0, %s68
    %s71 = sphi 0, %s70
    %s85 = sphi 0, %s71
    %s89 = sphi 0, %s89
    %s91 = sphi 0, %s89
    %s92 = sphi 0, %s91
    %s106 = sphi 0, %s92
    %s110 = sphi 0, %s110
    %s112 = sphi 0, %s110
    %s113 = sphi 0, %s112
    %s127 = sphi 0, %s113
    %s131 = sphi 0, %s131
    %s133 = sphi 0, %s131
    %s134 = sphi 0, %s133
    %s148 = sphi 0, %s134
    %s152 = sphi 0, %s152
    %s154 = sphi 0, %s152
    %s155 = sphi 0, %s154
    %s169 = sphi 0, %s155
    %s175 = sphi 0, %s177
    %s178 = sphi 0, %s175
    %s179 = sphi 0, %s178
    %s195 = sphi 0, %s179
  $region4: #{mlp_forward.1} parent=0 // loop_header_branch
    %16 = sbr.rel (%p14) target = $region8
  $region5: #{mlp_forward.1} parent=0 // loop_body
    %s18 = ssub.s32 %s13, 1
    %s19 = ssub.s32 %s13, 2
    %s20 = sadd.s32 %s13, 1
    %s21 = ssub.s32 %s13, %s20
    %p22 = scmp.eq.s32.totalorder %s21, 0
    %s24 = sadd.s32 %s23, 1
    %s25 = scalar_select %p22, %s23, %s24
    %p28 = pneg %p22
    %p29 = scmp.eq.s32.totalorder %s13, 1
    %p30 = por %p28, %p29
    %p31 = scmp.ne.s32.totalorder %s23, %s26
    %p32 = scmp.eq.s32.totalorder %s13, 0
    %p33 = por %p31, %p32
    %p34 = scmp.ne.s32.totalorder %s23, %s26
    %p35 = scmp.eq.s32.totalorder %s18, 1
    %p36 = por %p34, %p35
    %p37 = scmp.ne.s32.totalorder %s26, %s27
    %p38 = scmp.eq.s32.totalorder %s18, 0
    %p39 = por %p37, %p38
    %p40 = scmp.ne.s32.totalorder %s26, %s27
    %p41 = scmp.eq.s32.totalorder %s19, 1
    %p42 = por %p40, %p41
    %p44 = scmp.ne.s32.totalorder %s27, %s43
    %p45 = scmp.eq.s32.totalorder %s19, 0
    %p46 = por %p44, %p45
    %s48 = sadd.s32 %s47, 1
    %p51 = scmp.eq.s32.totalorder %s13, 1
    %p52 = scmp.ne.s32.totalorder %s47, %s49
    %p53 = scmp.eq.s32.totalorder %s13, 0
    %p54 = por %p52, %p53
    %p55 = scmp.ne.s32.totalorder %s47, %s49
    %p56 = scmp.eq.s32.totalorder %s18, 1
    %p57 = por %p55, %p56
    %p58 = scmp.ne.s32.totalorder %s49, %s50
    %p59 = scmp.eq.s32.totalorder %s18, 0
    %p60 = por %p58, %p59
    %p61 = scmp.ne.s32.totalorder %s49, %s50
    %p62 = scmp.eq.s32.totalorder %s19, 1
    %p63 = por %p61, %p62
    %p65 = scmp.ne.s32.totalorder %s50, %s64
    %p66 = scmp.eq.s32.totalorder %s19, 0
    %p67 = por %p65, %p66
    %s69 = sadd.s32 %s68, 1
    %p72 = scmp.eq.s32.totalorder %s13, 1
    %p73 = scmp.ne.s32.totalorder %s68, %s70
    %p74 = scmp.eq.s32.totalorder %s13, 0
    %p75 = por %p73, %p74
    %p76 = scmp.ne.s32.totalorder %s68, %s70
    %p77 = scmp.eq.s32.totalorder %s18, 1
    %p78 = por %p76, %p77
    %p79 = scmp.ne.s32.totalorder %s70, %s71
    %p80 = scmp.eq.s32.totalorder %s18, 0
    %p81 = por %p79, %p80
    %p82 = scmp.ne.s32.totalorder %s70, %s71
    %p83 = scmp.eq.s32.totalorder %s19, 1
    %p84 = por %p82, %p83
    %p86 = scmp.ne.s32.totalorder %s71, %s85
    %p87 = scmp.eq.s32.totalorder %s19, 0
    %p88 = por %p86, %p87
    %s90 = sadd.s32 %s89, 1
    %p93 = scmp.eq.s32.totalorder %s13, 1
    %p94 = scmp.ne.s32.totalorder %s89, %s91
    %p95 = scmp.eq.s32.totalorder %s13, 0
    %p96 = por %p94, %p95
    %p97 = scmp.ne.s32.totalorder %s89, %s91
    %p98 = scmp.eq.s32.totalorder %s18, 1
    %p99 = por %p97, %p98
    %p100 = scmp.ne.s32.totalorder %s91, %s92
    %p101 = scmp.eq.s32.totalorder %s18, 0
    %p102 = por %p100, %p101
    %p103 = scmp.ne.s32.totalorder %s91, %s92
    %p104 = scmp.eq.s32.totalorder %s19, 1
    %p105 = por %p103, %p104
    %p107 = scmp.ne.s32.totalorder %s92, %s106
    %p108 = scmp.eq.s32.totalorder %s19, 0
    %p109 = por %p107, %p108
    %s111 = sadd.s32 %s110, 1
    %p114 = scmp.eq.s32.totalorder %s13, 1
    %p115 = scmp.ne.s32.totalorder %s110, %s112
    %p116 = scmp.eq.s32.totalorder %s13, 0
    %p117 = por %p115, %p116
    %p118 = scmp.ne.s32.totalorder %s110, %s112
    %p119 = scmp.eq.s32.totalorder %s18, 1
    %p120 = por %p118, %p119
    %p121 = scmp.ne.s32.totalorder %s112, %s113
    %p122 = scmp.eq.s32.totalorder %s18, 0
    %p123 = por %p121, %p122
    %p124 = scmp.ne.s32.totalorder %s112, %s113
    %p125 = scmp.eq.s32.totalorder %s19, 1
    %p126 = por %p124, %p125
    %p128 = scmp.ne.s32.totalorder %s113, %s127
    %p129 = scmp.eq.s32.totalorder %s19, 0
    %p130 = por %p128, %p129
    %s132 = sadd.s32 %s131, 1
    %p135 = scmp.eq.s32.totalorder %s13, 1
    %p136 = scmp.ne.s32.totalorder %s131, %s133
    %p137 = scmp.eq.s32.totalorder %s13, 0
    %p138 = por %p136, %p137
    %p139 = scmp.ne.s32.totalorder %s131, %s133
    %p140 = scmp.eq.s32.totalorder %s18, 1
    %p141 = por %p139, %p140
    %p142 = scmp.ne.s32.totalorder %s133, %s134
    %p143 = scmp.eq.s32.totalorder %s18, 0
    %p144 = por %p142, %p143
    %p145 = scmp.ne.s32.totalorder %s133, %s134
    %p146 = scmp.eq.s32.totalorder %s19, 1
    %p147 = por %p145, %p146
    %p149 = scmp.ne.s32.totalorder %s134, %s148
    %p150 = scmp.eq.s32.totalorder %s19, 0
    %p151 = por %p149, %p150
    %s153 = sadd.s32 %s152, 1
    %p156 = scmp.eq.s32.totalorder %s13, 1
    %p157 = scmp.ne.s32.totalorder %s152, %s154
    %p158 = scmp.eq.s32.totalorder %s13, 0
    %p159 = por %p157, %p158
    %p160 = scmp.ne.s32.totalorder %s152, %s154
    %p161 = scmp.eq.s32.totalorder %s18, 1
    %p162 = por %p160, %p161
    %p163 = scmp.ne.s32.totalorder %s154, %s155
    %p164 = scmp.eq.s32.totalorder %s18, 0
    %p165 = por %p163, %p164
    %p166 = scmp.ne.s32.totalorder %s154, %s155
    %p167 = scmp.eq.s32.totalorder %s19, 1
    %p168 = por %p166, %p167
    %p170 = scmp.ne.s32.totalorder %s155, %s169
    %p171 = scmp.eq.s32.totalorder %s19, 0
    %p172 = por %p170, %p171
    %s173 = ssub.s32 %s13, %s20
    %p174 = scmp.eq.s32.totalorder %s173, 0
    %s176 = sadd.s32 %s175, 1
    %s177 = scalar_select %p174, %s175, %s176
    %p180 = pneg %p174
    %p181 = scmp.eq.s32.totalorder %s13, 1
    %p182 = por %p180, %p181
    %p183 = scmp.ne.s32.totalorder %s175, %s178
    %p184 = scmp.eq.s32.totalorder %s13, 0
    %p185 = por %p183, %p184
    %p186 = scmp.ne.s32.totalorder %s175, %s178
    %p187 = scmp.eq.s32.totalorder %s18, 1
    %p188 = por %p186, %p187
    %p189 = scmp.ne.s32.totalorder %s178, %s179
    %p190 = scmp.eq.s32.totalorder %s18, 0
    %p191 = por %p189, %p190
    %p192 = scmp.ne.s32.totalorder %s178, %s179
    %p193 = scmp.eq.s32.totalorder %s19, 1
    %p194 = por %p192, %p193
    %p196 = scmp.ne.s32.totalorder %s179, %s195
    %p197 = scmp.eq.s32.totalorder %s19, 0
    %p198 = por %p196, %p197
    %p199 = scmp.le.s32.totalorder 1, %s13
    %p200 = scmp.lt.s32.totalorder %s13, 3
    %p201 = pnand %p199, %p200
    %p202 = pneg %p201
    // Predicated region
    $region9: #{mlp_forward.1} parent=5 // pred_check
      _
    $region10: #{mlp_forward.1} parent=5 // pred_check_branch
      %204 = sbr.rel (%p201) target = $region12
    $region11: #{mlp_forward.1} parent=5 // pred_region
      %s205 = ssub.s32 %s13, 1
      // Predicated region
      $region13: #{mlp_forward.1} parent=11 // pred_check
        %p206 = pneg %p60
      $region14: #{mlp_forward.1} parent=11 // pred_check_branch
        %208 = sbr.rel (%p206) target = $region16
      $region15: #{mlp_forward.1} parent=11 // pred_region
        _
      $region16: #{mlp_forward.1} parent=11 // pred_fallthru
        _
      // Predicated region
      $region17: #{mlp_forward.1} parent=11 // pred_check
        %p209 = pneg %p81
      $region18: #{mlp_forward.1} parent=11 // pred_check_branch
        %211 = sbr.rel (%p209) target = $region20
      $region19: #{mlp_forward.1} parent=11 // pred_region
        _
      $region20: #{mlp_forward.1} parent=11 // pred_fallthru
        _
      // Predicated region
      $region21: #{mlp_forward.1} parent=11 // pred_check
        %p212 = pneg %p102
      $region22: #{mlp_forward.1} parent=11 // pred_check_branch
        %214 = sbr.rel (%p212) target = $region24
      $region23: #{mlp_forward.1} parent=11 // pred_region
        _
      $region24: #{mlp_forward.1} parent=11 // pred_fallthru
        _
      // Predicated region
      $region25: #{mlp_forward.1} parent=11 // pred_check
        %p215 = pneg %p123
      $region26: #{mlp_forward.1} parent=11 // pred_check_branch
        %217 = sbr.rel (%p215) target = $region28
      $region27: #{mlp_forward.1} parent=11 // pred_region
        _
      $region28: #{mlp_forward.1} parent=11 // pred_fallthru
        _
      // Predicated region
      $region29: #{mlp_forward.1} parent=11 // pred_check
        %p218 = pneg %p144
      $region30: #{mlp_forward.1} parent=11 // pred_check_branch
        %220 = sbr.rel (%p218) target = $region32
      $region31: #{mlp_forward.1} parent=11 // pred_region
        _
      $region32: #{mlp_forward.1} parent=11 // pred_fallthru
        _
      // Predicated region
      $region33: #{mlp_forward.1} parent=11 // pred_check
        %p221 = pneg %p165
      $region34: #{mlp_forward.1} parent=11 // pred_check_branch
        %223 = sbr.rel (%p221) target = $region36
      $region35: #{mlp_forward.1} parent=11 // pred_region
        _
      $region36: #{mlp_forward.1} parent=11 // pred_fallthru
        _
    $region12: #{mlp_forward.1} parent=5 // pred_fallthru
      _
    %p224 = scmp.lt.s32.totalorder %s13, 2
    // Predicated region
    $region37: #{mlp_forward.1} parent=5 // pred_check
      %p225 = pneg %p224
    $region38: #{mlp_forward.1} parent=5 // pred_check_branch
      %227 = sbr.rel (%p225) target = $region40
    $region39: #{mlp_forward.1} parent=5 // pred_region
      // Predicated region
      $region41: #{mlp_forward.1} parent=39 // pred_check
        %p228 = pneg %p33
      $region42: #{mlp_forward.1} parent=39 // pred_check_branch
        %230 = sbr.rel (%p228) target = $region44
      $region43: #{mlp_forward.1} parent=39 // pred_region
        %s231 = smul.u32 14, %s13
        %p232 = scmp.lt.s32.totalorder %s231, 27
        %s233 = scalar_select %p232, %s231, 27
        %s234 = smul.addr %s233, 8
        %s235 = scalar_lea.vmem %s0, %s234
        %s236 = smul.u32 14, %s13
      $region44: #{mlp_forward.1} parent=39 // pred_fallthru
        _
    $region40: #{mlp_forward.1} parent=5 // pred_fallthru
      _
    %p237 = scmp.le.s32.totalorder 1, %s13
    %p238 = scmp.lt.s32.totalorder %s13, 3
    %p239 = pnand %p237, %p238
    %p240 = pneg %p239
    // Predicated region
    $region45: #{mlp_forward.1} parent=5 // pred_check
      _
    $region46: #{mlp_forward.1} parent=5 // pred_check_branch
      %242 = sbr.rel (%p239) target = $region48
    $region47: #{mlp_forward.1} parent=5 // pred_region
      %s243 = ssub.s32 %s13, 1
      %s244 = smul.u32 14, %s18
      %p245 = scmp.lt.s32.totalorder %s244, 27
      %s246 = scalar_select %p245, %s244, 27
      %s247 = smul.addr %s246, 8
      %s248 = scalar_lea.vmem %s0, %s247
      %p249 = pneg %p39
      %p250 = pneg %p36
      %p251 = pneg %p60
      %p252 = pneg %p57
      %p253 = pneg %p81
      %p254 = pneg %p78
      %p255 = pneg %p102
      %p256 = pneg %p99
      %p257 = pneg %p123
      %p258 = pneg %p120
      %p259 = pneg %p144
      %p260 = pneg %p141
      %p261 = pneg %p165
      %p262 = pneg %p162
      %p263 = pneg %p191
      %p264 = pneg %p188
      %s265 = smul.u32 14, %s18
      %p266 = scmp.lt.s32.totalorder %s265, 27
      %s267 = scalar_select %p266, %s265, 27
      %s268 = smul.addr %s267, 4
      %s269 = scalar_lea.vmem %s7, %s268
      %s270 = smul.u32 14, %s18
      %p271 = scmp.lt.s32.totalorder %s270, 27
      %s272 = scalar_select %p271, %s270, 27
      %s273 = smul.addr %s272, 8
      %s274 = scalar_lea.vmem %s0, %s273
      %s275 = smul.u32 14, %s18
      %s276 = smul.u32 14, %s18
      %p277 = scmp.lt.s32.totalorder %s276, 27
      %s278 = scalar_select %p277, %s276, 27
      %s279 = smul.addr %s278, 4
      %s280 = scalar_lea.vmem %s7, %s279
      %s281 = smul.u32 14, %s18
      %v283 = vld [vmem:[%s274] sm:$0xff]
      %v284 = vld [vmem:[%s274 + $0x8] sm:$0xff]
      %v285 = vld [vmem:[%s274 + $0x10] sm:$0xff]
      %v286 = vld [vmem:[%s274 + $0x18] sm:$0xff]
      %v287 = vld [vmem:[%s274 + $0x20] sm:$0xff]
      %v288 = vld [vmem:[%s274 + $0x28] sm:$0xff]
      %v289 = vld [vmem:[%s274 + $0x30] sm:$0xff]
      %v290 = vld [vmem:[%s274 + $0x38] sm:$0xff]
      %v291 = vld [vmem:[%s274 + $0x40] sm:$0xff]
      %v292 = vld [vmem:[%s274 + $0x48] sm:$0xff]
      %v293 = vld [vmem:[%s274 + $0x50] sm:$0xff]
      %v294 = vld [vmem:[%s274 + $0x58] sm:$0xff]
      %v295 = vld [vmem:[%s274 + $0x60] sm:$0xff]
      %v296 = vld [vmem:[%s274 + $0x68] sm:$0xff]
      %v297 = vpack.c.bf16 %v284, %v283
      %v298 = vpack.c.bf16 %v286, %v285
      %v299 = vpack.c.bf16 %v288, %v287
      %v300 = vpack.c.bf16 %v290, %v289
      %v301 = vpack.c.bf16 %v292, %v291
      %v302 = vpack.c.bf16 %v294, %v293
      %v303 = vpack.c.bf16 %v296, %v295
      %v304 = vld [vmem:[%s1] sm:$0xff]
      %v305 = vld [vmem:[%s1 + $0x8] sm:$0xff]
      %v306 = vld [vmem:[%s1 + $0x10] sm:$0xff]
      %v307 = vld [vmem:[%s1 + $0x18] sm:$0xff]
      %v308 = vld [vmem:[%s1 + $0x20] sm:$0xff]
      %v309 = vld [vmem:[%s1 + $0x28] sm:$0xff]
      %v310 = vld [vmem:[%s1 + $0x30] sm:$0xff]
      %v311 = vld [vmem:[%s1 + $0x38] sm:$0xff]
      %v312 = vld [vmem:[%s1 + $0x40] sm:$0xff]
      %v313 = vld [vmem:[%s1 + $0x48] sm:$0xff]
      %v314 = vld [vmem:[%s1 + $0x50] sm:$0xff]
      %v315 = vld [vmem:[%s1 + $0x58] sm:$0xff]
      %v316 = vld [vmem:[%s1 + $0x60] sm:$0xff]
      %v317 = vld [vmem:[%s1 + $0x68] sm:$0xff]
      %v318 = vld [vmem:[%s1 + $0x70] sm:$0xff]
      %v319 = vld [vmem:[%s1 + $0x78] sm:$0xff]
      %v320 = vld [vmem:[%s2] sm:$0x3]
      %v322 = vlaneseq
      %v323 = vshrl.u32 %v322, 7
      %v324 = vsub.s32 0, %v323
      %v325 = vrot.slane %v320, %v324
      %v326 = vlaneseq
      %v327 = vshrl.u32 %v326, 7
      %v328 = vsub.s32 1, %v327
      %v329 = vrot.slane %v320, %v328
      %v348 = vunpack.c.l.b16 %v304
      %v349 = vunpack.c.h.b16 %v304
      %v350 = vunpack.c.l.b16 %v305
      %v351 = vunpack.c.h.b16 %v305
      %v352 = vunpack.c.l.b16 %v306
      %v353 = vunpack.c.h.b16 %v306
      %v354 = vunpack.c.l.b16 %v307
      %v355 = vunpack.c.h.b16 %v307
      %v356 = vunpack.c.l.b16 %v308
      %v357 = vunpack.c.h.b16 %v308
      %v358 = vunpack.c.l.b16 %v309
      %v359 = vunpack.c.h.b16 %v309
      %v360 = vunpack.c.l.b16 %v310
      %v361 = vunpack.c.h.b16 %v310
      %v362 = vunpack.c.l.b16 %v311
      %v363 = vunpack.c.h.b16 %v311
      %v364 = vunpack.c.l.b16 %v312
      %v365 = vunpack.c.h.b16 %v312
      %v366 = vunpack.c.l.b16 %v313
      %v367 = vunpack.c.h.b16 %v313
      %v368 = vunpack.c.l.b16 %v314
      %v369 = vunpack.c.h.b16 %v314
      %v370 = vunpack.c.l.b16 %v315
      %v371 = vunpack.c.h.b16 %v315
      %v372 = vunpack.c.l.b16 %v316
      %v373 = vunpack.c.h.b16 %v316
      %v374 = vunpack.c.l.b16 %v317
      %v375 = vunpack.c.h.b16 %v317
      %v376 = vunpack.c.l.b16 %v318
      %v377 = vunpack.c.h.b16 %v318
      %v378 = vunpack.c.l.b16 %v319
      %v379 = vunpack.c.h.b16 %v319
      %v380 = vpack.c.b16 %v350, %v348
      %v381 = vpack.c.b16 %v351, %v349
      %v382 = vpack.c.b16 %v354, %v352
      %v383 = vpack.c.b16 %v355, %v353
      %v384 = vpack.c.b16 %v358, %v356
      %v385 = vpack.c.b16 %v359, %v357
      %v386 = vpack.c.b16 %v362, %v360
      %v387 = vpack.c.b16 %v363, %v361
      %v388 = vpack.c.b16 %v366, %v364
      %v389 = vpack.c.b16 %v367, %v365
      %v390 = vpack.c.b16 %v370, %v368
      %v391 = vpack.c.b16 %v371, %v369
      %v392 = vpack.c.b16 %v374, %v372
      %v393 = vpack.c.b16 %v375, %v373
      %v394 = vpack.c.b16 %v378, %v376
      %v395 = vpack.c.b16 %v379, %v377
      %412 = vmatprep.subr.bf16.mxu0 %v381
      %413 = vmatpush1.bf16.msra.mxu0 %v380
      %414 = vmatprep.subr.bf16.mxu0 %v383
      %415 = vmatpush1.bf16.msra.mxu0 %v382
      %416 = vmatprep.subr.bf16.mxu0 %v385
      %417 = vmatpush1.bf16.msra.mxu0 %v384
      %418 = vmatprep.subr.bf16.mxu0 %v387
      %419 = vmatpush1.bf16.msra.mxu0 %v386
      %420 = vmatprep.subr.bf16.mxu0 %v389
      %421 = vmatpush1.bf16.msra.mxu0 %v388
      %422 = vmatprep.subr.bf16.mxu0 %v391
      %423 = vmatpush1.bf16.msra.mxu0 %v390
      %424 = vmatprep.subr.bf16.mxu0 %v393
      %425 = vmatpush1.bf16.msra.mxu0 %v392
      %426 = vmatprep.subr.bf16.mxu0 %v395
      %427 = vmatpush1.bf16.msra.mxu0 %v394
      %428 = vmatprep.subr.bf16.mxu0 0
      %429 = vmatpush1.bf16.msra.mxu0 0
      %430 = vmatprep.subr.bf16.mxu0 0
      %431 = vmatpush1.bf16.msra.mxu0 0
      %432 = vmatprep.subr.bf16.mxu0 0
      %433 = vmatpush1.bf16.msra.mxu0 0
      %434 = vmatprep.subr.bf16.mxu0 0
      %435 = vmatpush1.bf16.msra.mxu0 0
      %436 = vmatprep.subr.bf16.mxu0 0
      %437 = vmatpush1.bf16.msra.mxu0 0
      %438 = vmatprep.subr.bf16.mxu0 0
      %439 = vmatpush1.bf16.msra.mxu0 0
      %440 = vmatprep.subr.bf16.mxu0 0
      %441 = vmatpush1.bf16.msra.mxu0 0
      %442 = vmatprep.subr.bf16.mxu0 0
      %443 = vmatpush1.bf16.msra.mxu0 0
      %444 = vmatprep.mubr.bf16.mxu0 0
      %445 = vmatmul.mubr.bf16.gmra.mrb[0].mxu0 %v297
      %v446 = vpop.f32.mrb[0].mxu0
      %v447 = vadd.f32 %v325, %v446
      %v448 = vpop.f32.mrb[0].mxu0
      %v449 = vadd.f32 %v329, %v448
      %v450 = vpop.f32.mrb[0].mxu0
      %v451 = vadd.f32 %v325, %v450
      %v452 = vpop.f32.mrb[0].mxu0
      %v453 = vadd.f32 %v329, %v452
      %454 = vmatprep.mubr.bf16.mxu0 0
      %455 = vmatmul.mubr.bf16.gmra.mrb[0].mxu0 %v298
      %v456 = vpop.f32.mrb[0].mxu0
      %v457 = vadd.f32 %v325, %v456
      %v458 = vpop.f32.mrb[0].mxu0
      %v459 = vadd.f32 %v329, %v458
      %v460 = vpop.f32.mrb[0].mxu0
      %v461 = vadd.f32 %v325, %v460
      %v462 = vpop.f32.mrb[0].mxu0
      %v463 = vadd.f32 %v329, %v462
      %464 = vmatprep.mubr.bf16.mxu0 0
      %465 = vmatmul.mubr.bf16.gmra.mrb[0].mxu0 %v299
      %v466 = vpop.f32.mrb[0].mxu0
      %v467 = vadd.f32 %v325, %v466
      %v468 = vpop.f32.mrb[0].mxu0
      %v469 = vadd.f32 %v329, %v468
      %v470 = vpop.f32.mrb[0].mxu0
      %v471 = vadd.f32 %v325, %v470
      %v472 = vpop.f32.mrb[0].mxu0
      %v473 = vadd.f32 %v329, %v472
      %474 = vmatprep.mubr.bf16.mxu0 0
      %475 = vmatmul.mubr.bf16.gmra.mrb[0].mxu0 %v300
      %v476 = vpop.f32.mrb[0].mxu0
      %v477 = vadd.f32 %v325, %v476
      %v478 = vpop.f32.mrb[0].mxu0
      %v479 = vadd.f32 %v329, %v478
      %v480 = vpop.f32.mrb[0].mxu0
      %v481 = vadd.f32 %v325, %v480
      %v482 = vpop.f32.mrb[0].mxu0
      %v483 = vadd.f32 %v329, %v482
      %484 = vmatprep.mubr.bf16.mxu0 0
      %485 = vmatmul.mubr.bf16.gmra.mrb[0].mxu0 %v301
      %v486 = vpop.f32.mrb[0].mxu0
      %v487 = vadd.f32 %v325, %v486
      %v488 = vpop.f32.mrb[0].mxu0
      %v489 = vadd.f32 %v329, %v488
      %v490 = vpop.f32.mrb[0].mxu0
      %v491 = vadd.f32 %v325, %v490
      %v492 = vpop.f32.mrb[0].mxu0
      %v493 = vadd.f32 %v329, %v492
      %494 = vmatprep.mubr.bf16.mxu0 0
      %495 = vmatmul.mubr.bf16.gmra.mrb[0].mxu0 %v302
      %v496 = vpop.f32.mrb[0].mxu0
      %v497 = vadd.f32 %v325, %v496
      %v498 = vpop.f32.mrb[0].mxu0
      %v499 = vadd.f32 %v329, %v498
      %v500 = vpop.f32.mrb[0].mxu0
      %v501 = vadd.f32 %v325, %v500
      %v502 = vpop.f32.mrb[0].mxu0
      %v503 = vadd.f32 %v329, %v502
      %504 = vmatprep.mubr.bf16.mxu0 0
      %505 = vmatmul.mubr.bf16.gmra.mrb[0].mxu0 %v303
      %v506 = vpop.f32.mrb[0].mxu0
      %v507 = vadd.f32 %v325, %v506
      %v508 = vpop.f32.mrb[0].mxu0
      %v509 = vadd.f32 %v329, %v508
      %v510 = vpop.f32.mrb[0].mxu0
      %v511 = vadd.f32 %v325, %v510
      %v512 = vpop.f32.mrb[0].mxu0
      %v513 = vadd.f32 %v329, %v512
      %514 = vdwg.mxu0
      %v515 = vmax.f32 %v447, 0.0
      %v516 = vmax.f32 %v449, 0.0
      %v517 = vmax.f32 %v451, 0.0
      %v518 = vmax.f32 %v453, 0.0
      %v519 = vmax.f32 %v457, 0.0
      %v520 = vmax.f32 %v459, 0.0
      %v521 = vmax.f32 %v461, 0.0
      %v522 = vmax.f32 %v463, 0.0
      %v523 = vmax.f32 %v467, 0.0
      %v524 = vmax.f32 %v469, 0.0
      %v525 = vmax.f32 %v471, 0.0
      %v526 = vmax.f32 %v473, 0.0
      %v527 = vmax.f32 %v477, 0.0
      %v528 = vmax.f32 %v479, 0.0
      %v529 = vmax.f32 %v481, 0.0
      %v530 = vmax.f32 %v483, 0.0
      %v531 = vmax.f32 %v487, 0.0
      %v532 = vmax.f32 %v489, 0.0
      %v533 = vmax.f32 %v491, 0.0
      %v534 = vmax.f32 %v493, 0.0
      %v535 = vmax.f32 %v497, 0.0
      %v536 = vmax.f32 %v499, 0.0
      %v537 = vmax.f32 %v501, 0.0
      %v538 = vmax.f32 %v503, 0.0
      %v539 = vmax.f32 %v507, 0.0
      %v540 = vmax.f32 %v509, 0.0
      %v541 = vmax.f32 %v511, 0.0
      %v542 = vmax.f32 %v513, 0.0
      %v543 = vpack.c.bf16 %v517, %v515
      %v544 = vpack.c.bf16 %v518, %v516
      %v545 = vpack.c.bf16 %v521, %v519
      %v546 = vpack.c.bf16 %v522, %v520
      %v547 = vpack.c.bf16 %v525, %v523
      %v548 = vpack.c.bf16 %v526, %v524
      %v549 = vpack.c.bf16 %v529, %v527
      %v550 = vpack.c.bf16 %v530, %v528
      %v551 = vpack.c.bf16 %v533, %v531
      %v552 = vpack.c.bf16 %v534, %v532
      %v553 = vpack.c.bf16 %v537, %v535
      %v554 = vpack.c.bf16 %v538, %v536
      %v555 = vpack.c.bf16 %v541, %v539
      %v556 = vpack.c.bf16 %v542, %v540
      %v557 = vld [vmem:[%s3] sm:$0xf]
      %v558 = vld [vmem:[%s3 + $0x4] sm:$0xf]
      %v559 = vld [vmem:[%s3 + $0x8] sm:$0xf]
      %v560 = vld [vmem:[%s3 + $0xc] sm:$0xf]
      %v561 = vld [vmem:[%s3 + $0x10] sm:$0xf]
      %v562 = vld [vmem:[%s3 + $0x14] sm:$0xf]
      %v563 = vld [vmem:[%s3 + $0x18] sm:$0xf]
      %v564 = vld [vmem:[%s3 + $0x1c] sm:$0xf]
      %v565 = vld [vmem:[%s3 + $0x20] sm:$0xf]
      %v566 = vld [vmem:[%s3 + $0x24] sm:$0xf]
      %v567 = vld [vmem:[%s3 + $0x28] sm:$0xf]
      %v568 = vld [vmem:[%s3 + $0x2c] sm:$0xf]
      %v569 = vld [vmem:[%s3 + $0x30] sm:$0xf]
      %v570 = vld [vmem:[%s3 + $0x34] sm:$0xf]
      %v571 = vld [vmem:[%s3 + $0x38] sm:$0xf]
      %v572 = vld [vmem:[%s3 + $0x3c] sm:$0xf]
      %v573 = vld [vmem:[%s3 + $0x40] sm:$0xf]
      %v574 = vld [vmem:[%s3 + $0x44] sm:$0xf]
      %v575 = vld [vmem:[%s3 + $0x48] sm:$0xf]
      %v576 = vld [vmem:[%s3 + $0x4c] sm:$0xf]
      %v577 = vld [vmem:[%s3 + $0x50] sm:$0xf]
      %v578 = vld [vmem:[%s3 + $0x54] sm:$0xf]
      %v579 = vld [vmem:[%s3 + $0x58] sm:$0xf]
      %v580 = vld [vmem:[%s3 + $0x5c] sm:$0xf]
      %v581 = vld [vmem:[%s3 + $0x60] sm:$0xf]
      %v582 = vld [vmem:[%s3 + $0x64] sm:$0xf]
      %v583 = vld [vmem:[%s3 + $0x68] sm:$0xf]
      %v584 = vld [vmem:[%s3 + $0x6c] sm:$0xf]
      %v585 = vld [vmem:[%s3 + $0x70] sm:$0xf]
      %v586 = vld [vmem:[%s3 + $0x74] sm:$0xf]
      %v587 = vld [vmem:[%s3 + $0x78] sm:$0xf]
      %v588 = vld [vmem:[%s3 + $0x7c] sm:$0xf]
      %v589 = vld [vmem:[%s4] sm:$0x1]
      %v591 = vlaneseq
      %v592 = vshrl.u32 %v591, 7
      %v593 = vsub.s32 0, %v592
      %v594 = vrot.slane %v589, %v593
      %v628 = vunpack.c.l.b16 %v557
      %v629 = vunpack.c.l.b16 %v558
      %v630 = vunpack.c.l.b16 %v559
      %v631 = vunpack.c.l.b16 %v560
      %v632 = vunpack.c.l.b16 %v561
      %v633 = vunpack.c.l.b16 %v562
      %v634 = vunpack.c.l.b16 %v563
      %v635 = vunpack.c.l.b16 %v564
      %v636 = vunpack.c.l.b16 %v565
      %v637 = vunpack.c.l.b16 %v566
      %v638 = vunpack.c.l.b16 %v567
      %v639 = vunpack.c.l.b16 %v568
      %v640 = vunpack.c.l.b16 %v569
      %v641 = vunpack.c.l.b16 %v570
      %v642 = vunpack.c.l.b16 %v571
      %v643 = vunpack.c.l.b16 %v572
      %v644 = vunpack.c.l.b16 %v573
      %v645 = vunpack.c.l.b16 %v574
      %v646 = vunpack.c.l.b16 %v575
      %v647 = vunpack.c.l.b16 %v576
      %v648 = vunpack.c.l.b16 %v577
      %v649 = vunpack.c.l.b16 %v578
      %v650 = vunpack.c.l.b16 %v579
      %v651 = vunpack.c.l.b16 %v580
      %v652 = vunpack.c.l.b16 %v581
      %v653 = vunpack.c.l.b16 %v582
      %v654 = vunpack.c.l.b16 %v583
      %v655 = vunpack.c.l.b16 %v584
      %v656 = vunpack.c.l.b16 %v585
      %v657 = vunpack.c.l.b16 %v586
      %v658 = vunpack.c.l.b16 %v587
      %v659 = vunpack.c.l.b16 %v588
      %v660 = vpack.c.b16 %v629, %v628
      %v661 = vpack.c.b16 %v631, %v630
      %v662 = vpack.c.b16 %v633, %v632
      %v663 = vpack.c.b16 %v635, %v634
      %v664 = vpack.c.b16 %v637, %v636
      %v665 = vpack.c.b16 %v639, %v638
      %v666 = vpack.c.b16 %v641, %v640
      %v667 = vpack.c.b16 %v643, %v642
      %v668 = vpack.c.b16 %v645, %v644
      %v669 = vpack.c.b16 %v647, %v646
      %v670 = vpack.c.b16 %v649, %v648
      %v671 = vpack.c.b16 %v651, %v650
      %v672 = vpack.c.b16 %v653, %v652
      %v673 = vpack.c.b16 %v655, %v654
      %v674 = vpack.c.b16 %v657, %v656
      %v675 = vpack.c.b16 %v659, %v658
      %692 = vmatprep.subr.bf16.mxu0 0
      %693 = vmatpush1.bf16.msra.mxu0 %v660
      %694 = vmatprep.subr.bf16.mxu0 0
      %695 = vmatpush1.bf16.msra.mxu0 %v661
      %696 = vmatprep.subr.bf16.mxu0 0
      %697 = vmatpush1.bf16.msra.mxu0 %v662
      %698 = vmatprep.subr.bf16.mxu0 0
      %699 = vmatpush1.bf16.msra.mxu0 %v663
      %700 = vmatprep.subr.bf16.mxu0 0
      %701 = vmatpush1.bf16.msra.mxu0 %v664
      %702 = vmatprep.subr.bf16.mxu0 0
      %703 = vmatpush1.bf16.msra.mxu0 %v665
      %704 = vmatprep.subr.bf16.mxu0 0
      %705 = vmatpush1.bf16.msra.mxu0 %v666
      %706 = vmatprep.subr.bf16.mxu0 0
      %707 = vmatpush1.bf16.msra.mxu0 %v667
      %708 = vmatprep.subr.bf16.mxu0 0
      %709 = vmatpush1.bf16.msra.mxu0 %v668
      %710 = vmatprep.subr.bf16.mxu0 0
      %711 = vmatpush1.bf16.msra.mxu0 %v669
      %712 = vmatprep.subr.bf16.mxu0 0
      %713 = vmatpush1.bf16.msra.mxu0 %v670
      %714 = vmatprep.subr.bf16.mxu0 0
      %715 = vmatpush1.bf16.msra.mxu0 %v671
      %716 = vmatprep.subr.bf16.mxu0 0
      %717 = vmatpush1.bf16.msra.mxu0 %v672
      %718 = vmatprep.subr.bf16.mxu0 0
      %719 = vmatpush1.bf16.msra.mxu0 %v673
      %720 = vmatprep.subr.bf16.mxu0 0
      %721 = vmatpush1.bf16.msra.mxu0 %v674
      %722 = vmatprep.subr.bf16.mxu0 0
      %723 = vmatpush1.bf16.msra.mxu0 %v675
      %724 = vmatprep.mubr.bf16.mxu0 %v544
      %725 = vmatmul.mubr.bf16.gmra.mrb[0].mxu0 %v543
      %v726 = vpop.f32.mrb[0].mxu0
      %v727 = vadd.f32 %v594, %v726
      %v728 = vpop.f32.mrb[0].mxu0
      %v729 = vpop.f32.mrb[0].mxu0
      %v730 = vadd.f32 %v594, %v729
      %v731 = vpop.f32.mrb[0].mxu0
      %732 = vmatprep.mubr.bf16.mxu0 %v546
      %733 = vmatmul.mubr.bf16.gmra.mrb[0].mxu0 %v545
      %v734 = vpop.f32.mrb[0].mxu0
      %v735 = vadd.f32 %v594, %v734
      %v736 = vpop.f32.mrb[0].mxu0
      %v737 = vpop.f32.mrb[0].mxu0
      %v738 = vadd.f32 %v594, %v737
      %v739 = vpop.f32.mrb[0].mxu0
      %740 = vmatprep.mubr.bf16.mxu0 %v548
      %741 = vmatmul.mubr.bf16.gmra.mrb[0].mxu0 %v547
      %v742 = vpop.f32.mrb[0].mxu0
      %v743 = vadd.f32 %v594, %v742
      %v744 = vpop.f32.mrb[0].mxu0
      %v745 = vpop.f32.mrb[0].mxu0
      %v746 = vadd.f32 %v594, %v745
      %v747 = vpop.f32.mrb[0].mxu0
      %748 = vmatprep.mubr.bf16.mxu0 %v550
      %749 = vmatmul.mubr.bf16.gmra.mrb[0].mxu0 %v549
      %v750 = vpop.f32.mrb[0].mxu0
      %v751 = vadd.f32 %v594, %v750
      %v752 = vpop.f32.mrb[0].mxu0
      %v753 = vpop.f32.mrb[0].mxu0
      %v754 = vadd.f32 %v594, %v753
      %v755 = vpop.f32.mrb[0].mxu0
      %756 = vmatprep.mubr.bf16.mxu0 %v552
      %757 = vmatmul.mubr.bf16.gmra.mrb[0].mxu0 %v551
      %v758 = vpop.f32.mrb[0].mxu0
      %v759 = vadd.f32 %v594, %v758
      %v760 = vpop.f32.mrb[0].mxu0
      %v761 = vpop.f32.mrb[0].mxu0
      %v762 = vadd.f32 %v594, %v761
      %v763 = vpop.f32.mrb[0].mxu0
      %764 = vmatprep.mubr.bf16.mxu0 %v554
      %765 = vmatmul.mubr.bf16.gmra.mrb[0].mxu0 %v553
      %v766 = vpop.f32.mrb[0].mxu0
      %v767 = vadd.f32 %v594, %v766
      %v768 = vpop.f32.mrb[0].mxu0
      %v769 = vpop.f32.mrb[0].mxu0
      %v770 = vadd.f32 %v594, %v769
      %v771 = vpop.f32.mrb[0].mxu0
      %772 = vmatprep.mubr.bf16.mxu0 %v556
      %773 = vmatmul.mubr.bf16.gmra.mrb[0].mxu0 %v555
      %v774 = vpop.f32.mrb[0].mxu0
      %v775 = vadd.f32 %v594, %v774
      %v776 = vpop.f32.mrb[0].mxu0
      %v777 = vpop.f32.mrb[0].mxu0
      %v778 = vadd.f32 %v594, %v777
      %v779 = vpop.f32.mrb[0].mxu0
      %780 = vdwg.mxu0
      %v781 = vmax.f32 %v727, 0.0
      %v782 = vmax.f32 %v730, 0.0
      %v783 = vmax.f32 %v735, 0.0
      %v784 = vmax.f32 %v738, 0.0
      %v785 = vmax.f32 %v743, 0.0
      %v786 = vmax.f32 %v746, 0.0
      %v787 = vmax.f32 %v751, 0.0
      %v788 = vmax.f32 %v754, 0.0
      %v789 = vmax.f32 %v759, 0.0
      %v790 = vmax.f32 %v762, 0.0
      %v791 = vmax.f32 %v767, 0.0
      %v792 = vmax.f32 %v770, 0.0
      %v793 = vmax.f32 %v775, 0.0
      %v794 = vmax.f32 %v778, 0.0
      %v795 = vpack.c.bf16 %v782, %v781
      %v796 = vpack.c.bf16 %v784, %v783
      %v797 = vpack.c.bf16 %v786, %v785
      %v798 = vpack.c.bf16 %v788, %v787
      %v799 = vpack.c.bf16 %v790, %v789
      %v800 = vpack.c.bf16 %v792, %v791
      %v801 = vpack.c.bf16 %v794, %v793
      %v802 = vld [vmem:[%s5] sm:$0xf]
      %v803 = vld [vmem:[%s5 + $0x4] sm:$0xf]
      %v804 = vld [vmem:[%s5 + $0x8] sm:$0xf]
      %v805 = vld [vmem:[%s5 + $0xc] sm:$0xf]
      %v806 = vld [vmem:[%s5 + $0x10] sm:$0xf]
      %v807 = vld [vmem:[%s5 + $0x14] sm:$0xf]
      %v808 = vld [vmem:[%s5 + $0x18] sm:$0xf]
      %v809 = vld [vmem:[%s5 + $0x1c] sm:$0xf]
      %v810 = vld [vmem:[%s5 + $0x20] sm:$0xf]
      %v811 = vld [vmem:[%s5 + $0x24] sm:$0xf]
      %v812 = vld [vmem:[%s5 + $0x28] sm:$0xf]
      %v813 = vld [vmem:[%s5 + $0x2c] sm:$0xf]
      %v814 = vld [vmem:[%s5 + $0x30] sm:$0xf]
      %v815 = vld [vmem:[%s5 + $0x34] sm:$0xf]
      %v816 = vld [vmem:[%s5 + $0x38] sm:$0xf]
      %v817 = vld [vmem:[%s5 + $0x3c] sm:$0xf]
      %v818 = vld [vmem:[%s6] sm:$0x1]
      %v820 = vlaneseq
      %v821 = vshrl.u32 %v820, 7
      %v822 = vsub.s32 0, %v821
      %v823 = vrot.slane %v818, %v822
      %v841 = vunpack.c.l.b16 %v802
      %v842 = vunpack.c.l.b16 %v803
      %v843 = vunpack.c.l.b16 %v804
      %v844 = vunpack.c.l.b16 %v805
      %v845 = vunpack.c.l.b16 %v806
      %v846 = vunpack.c.l.b16 %v807
      %v847 = vunpack.c.l.b16 %v808
      %v848 = vunpack.c.l.b16 %v809
      %v849 = vunpack.c.l.b16 %v810
      %v850 = vunpack.c.l.b16 %v811
      %v851 = vunpack.c.l.b16 %v812
      %v852 = vunpack.c.l.b16 %v813
      %v853 = vunpack.c.l.b16 %v814
      %v854 = vunpack.c.l.b16 %v815
      %v855 = vunpack.c.l.b16 %v816
      %v856 = vunpack.c.l.b16 %v817
      %v857 = vpack.c.b16 %v842, %v841
      %v858 = vpack.c.b16 %v844, %v843
      %v859 = vpack.c.b16 %v846, %v845
      %v860 = vpack.c.b16 %v848, %v847
      %v861 = vpack.c.b16 %v850, %v849
      %v862 = vpack.c.b16 %v852, %v851
      %v863 = vpack.c.b16 %v854, %v853
      %v864 = vpack.c.b16 %v856, %v855
      %873 = vmatprep.subr.bf16.mxu0 0
      %874 = vmatpush1.bf16.msra.mxu0 %v857
      %875 = vmatprep.subr.bf16.mxu0 0
      %876 = vmatpush1.bf16.msra.mxu0 %v858
      %877 = vmatprep.subr.bf16.mxu0 0
      %878 = vmatpush1.bf16.msra.mxu0 %v859
      %879 = vmatprep.subr.bf16.mxu0 0
      %880 = vmatpush1.bf16.msra.mxu0 %v860
      %881 = vmatprep.subr.bf16.mxu0 0
      %882 = vmatpush1.bf16.msra.mxu0 %v861
      %883 = vmatprep.subr.bf16.mxu0 0
      %884 = vmatpush1.bf16.msra.mxu0 %v862
      %885 = vmatprep.subr.bf16.mxu0 0
      %886 = vmatpush1.bf16.msra.mxu0 %v863
      %887 = vmatprep.subr.bf16.mxu0 0
      %888 = vmatpush1.bf16.msra.mxu0 %v864
      %889 = vmatprep.subr.bf16.mxu0 0
      %890 = vmatpush1.bf16.msra.mxu0 0
      %891 = vmatprep.subr.bf16.mxu0 0
      %892 = vmatpush1.bf16.msra.mxu0 0
      %893 = vmatprep.subr.bf16.mxu0 0
      %894 = vmatpush1.bf16.msra.mxu0 0
      %895 = vmatprep.subr.bf16.mxu0 0
      %896 = vmatpush1.bf16.msra.mxu0 0
      %897 = vmatprep.subr.bf16.mxu0 0
      %898 = vmatpush1.bf16.msra.mxu0 0
      %899 = vmatprep.subr.bf16.mxu0 0
      %900 = vmatpush1.bf16.msra.mxu0 0
      %901 = vmatprep.subr.bf16.mxu0 0
      %902 = vmatpush1.bf16.msra.mxu0 0
      %903 = vmatprep.subr.bf16.mxu0 0
      %904 = vmatpush1.bf16.msra.mxu0 0
      %905 = vmatprep.mubr.bf16.mxu0 0
      %906 = vmatmul.mubr.bf16.gmra.mrb[0].mxu0 %v795
      %v907 = vpop.f32.mrb[0].mxu0
      %v908 = vadd.f32 %v823, %v907
      %v909 = vpop.f32.mrb[0].mxu0
      %v910 = vpop.f32.mrb[0].mxu0
      %v911 = vadd.f32 %v823, %v910
      %v912 = vpop.f32.mrb[0].mxu0
      %913 = vmatprep.mubr.bf16.mxu0 0
      %914 = vmatmul.mubr.bf16.gmra.mrb[0].mxu0 %v796
      %v915 = vpop.f32.mrb[0].mxu0
      %v916 = vadd.f32 %v823, %v915
      %v917 = vpop.f32.mrb[0].mxu0
      %v918 = vpop.f32.mrb[0].mxu0
      %v919 = vadd.f32 %v823, %v918
      %v920 = vpop.f32.mrb[0].mxu0
      %921 = vmatprep.mubr.bf16.mxu0 0
      %922 = vmatmul.mubr.bf16.gmra.mrb[0].mxu0 %v797
      %v923 = vpop.f32.mrb[0].mxu0
      %v924 = vadd.f32 %v823, %v923
      %v925 = vpop.f32.mrb[0].mxu0
      %v926 = vpop.f32.mrb[0].mxu0
      %v927 = vadd.f32 %v823, %v926
      %v928 = vpop.f32.mrb[0].mxu0
      %929 = vmatprep.mubr.bf16.mxu0 0
      %930 = vmatmul.mubr.bf16.gmra.mrb[0].mxu0 %v798
      %v931 = vpop.f32.mrb[0].mxu0
      %v932 = vadd.f32 %v823, %v931
      %v933 = vpop.f32.mrb[0].mxu0
      %v934 = vpop.f32.mrb[0].mxu0
      %v935 = vadd.f32 %v823, %v934
      %v936 = vpop.f32.mrb[0].mxu0
      %937 = vmatprep.mubr.bf16.mxu0 0
      %938 = vmatmul.mubr.bf16.gmra.mrb[0].mxu0 %v799
      %v939 = vpop.f32.mrb[0].mxu0
      %v940 = vadd.f32 %v823, %v939
      %v941 = vpop.f32.mrb[0].mxu0
      %v942 = vpop.f32.mrb[0].mxu0
      %v943 = vadd.f32 %v823, %v942
      %v944 = vpop.f32.mrb[0].mxu0
      %945 = vmatprep.mubr.bf16.mxu0 0
      %946 = vmatmul.mubr.bf16.gmra.mrb[0].mxu0 %v800
      %v947 = vpop.f32.mrb[0].mxu0
      %v948 = vadd.f32 %v823, %v947
      %v949 = vpop.f32.mrb[0].mxu0
      %v950 = vpop.f32.mrb[0].mxu0
      %v951 = vadd.f32 %v823, %v950
      %v952 = vpop.f32.mrb[0].mxu0
      %953 = vmatprep.mubr.bf16.mxu0 0
      %954 = vmatmul.mubr.bf16.gmra.mrb[0].mxu0 %v801
      %v955 = vpop.f32.mrb[0].mxu0
      %v956 = vadd.f32 %v823, %v955
      %v957 = vpop.f32.mrb[0].mxu0
      %v958 = vpop.f32.mrb[0].mxu0
      %v959 = vadd.f32 %v823, %v958
      %v960 = vpop.f32.mrb[0].mxu0
      %961 = vdwg.mxu0
      %v962 = vpack.c.bf16 %v911, %v908
      %v963 = vpack.c.bf16 %v919, %v916
      %v964 = vpack.c.bf16 %v927, %v924
      %v965 = vpack.c.bf16 %v935, %v932
      %v966 = vpack.c.bf16 %v943, %v940
      %v967 = vpack.c.bf16 %v951, %v948
      %v968 = vpack.c.bf16 %v959, %v956
      %v976 = vunpack.c.l.b16 %v962
      %v977 = vunpack.c.h.b16 %v962
      %v978 = vunpack.c.l.b16 %v963
      %v979 = vunpack.c.h.b16 %v963
      %v980 = vunpack.c.l.b16 %v964
      %v981 = vunpack.c.h.b16 %v964
      %v982 = vunpack.c.l.b16 %v965
      %v983 = vunpack.c.h.b16 %v965
      %v984 = vunpack.c.l.b16 %v966
      %v985 = vunpack.c.h.b16 %v966
      %v986 = vunpack.c.l.b16 %v967
      %v987 = vunpack.c.h.b16 %v967
      %v988 = vunpack.c.l.b16 %v968
      %v989 = vunpack.c.h.b16 %v968
      %v990 = vpack.c.b16 %v976, %v976
      %v991 = vpack.c.b16 %v977, %v977
      %v992 = vpack.c.b16 %v978, %v978
      %v993 = vpack.c.b16 %v979, %v979
      %v994 = vpack.c.b16 %v980, %v980
      %v995 = vpack.c.b16 %v981, %v981
      %v996 = vpack.c.b16 %v982, %v982
      %v997 = vpack.c.b16 %v983, %v983
      %v998 = vpack.c.b16 %v984, %v984
      %v999 = vpack.c.b16 %v985, %v985
      %v1000 = vpack.c.b16 %v986, %v986
      %v1001 = vpack.c.b16 %v987, %v987
      %v1002 = vpack.c.b16 %v988, %v988
      %v1003 = vpack.c.b16 %v989, %v989
      %1018 = vst [vmem:[%s280] sm:$0xf] %v990
      %1019 = vst [vmem:[%s280 + $0x4] sm:$0xf] %v991
      %1020 = vst [vmem:[%s280 + $0x8] sm:$0xf] %v992
      %1021 = vst [vmem:[%s280 + $0xc] sm:$0xf] %v993
      %1022 = vst [vmem:[%s280 + $0x10] sm:$0xf] %v994
      %1023 = vst [vmem:[%s280 + $0x14] sm:$0xf] %v995
      %1024 = vst [vmem:[%s280 + $0x18] sm:$0xf] %v996
      %1025 = vst [vmem:[%s280 + $0x1c] sm:$0xf] %v997
      %1026 = vst [vmem:[%s280 + $0x20] sm:$0xf] %v998
      %1027 = vst [vmem:[%s280 + $0x24] sm:$0xf] %v999
      %1028 = vst [vmem:[%s280 + $0x28] sm:$0xf] %v1000
      %1029 = vst [vmem:[%s280 + $0x2c] sm:$0xf] %v1001
      %1030 = vst [vmem:[%s280 + $0x30] sm:$0xf] %v1002
      %1031 = vst [vmem:[%s280 + $0x34] sm:$0xf] %v1003
      %s1032 = smul.u32 14, %s18
      %p1033 = scmp.lt.s32.totalorder %s1032, 27
      %s1034 = scalar_select %p1033, %s1032, 27
      %s1035 = smul.addr %s1034, 4
      %s1036 = scalar_lea.vmem %s7, %s1035
      // Predicated region
      $region49: #{mlp_forward.1} parent=47 // pred_check
        %p1037 = pneg %p188
      $region50: #{mlp_forward.1} parent=47 // pred_check_branch
        %1039 = sbr.rel (%p1037) target = $region52
      $region51: #{mlp_forward.1} parent=47 // pred_region
        %s1040 = smul.u32 14, %s18
      $region52: #{mlp_forward.1} parent=47 // pred_fallthru
        _
    $region48: #{mlp_forward.1} parent=5 // pred_fallthru
      _
    %p1041 = scmp.le.s32.totalorder 2, %s13
    // Predicated region
    $region53: #{mlp_forward.1} parent=5 // pred_check
      %p1042 = pneg %p1041
    $region54: #{mlp_forward.1} parent=5 // pred_check_branch
      %1044 = sbr.rel (%p1042) target = $region56
    $region55: #{mlp_forward.1} parent=5 // pred_region
      %s1045 = ssub.s32 %s13, 2
      // Predicated region
      $region57: #{mlp_forward.1} parent=55 // pred_check
        %p1046 = pneg %p194
      $region58: #{mlp_forward.1} parent=55 // pred_check_branch
        %1048 = sbr.rel (%p1046) target = $region60
      $region59: #{mlp_forward.1} parent=55 // pred_region
        %s1049 = smul.u32 14, %s19
        %p1050 = scmp.lt.s32.totalorder %s1049, 27
        %s1051 = scalar_select %p1050, %s1049, 27
        %s1052 = smul.addr %s1051, 4
        %s1053 = scalar_lea.vmem %s7, %s1052
      $region60: #{mlp_forward.1} parent=55 // pred_fallthru
        _
    $region56: #{mlp_forward.1} parent=5 // pred_fallthru
      _
  $region6: #{mlp_forward.1} parent=0 // loop_footer
    %s17 = sadd.s32 1, %s13
  $region7: #{mlp_forward.1} parent=0 // loop_footer_branch
    %12 = sbr.rel target = $region3
  $region8: #{mlp_forward.1} parent=0 // loop_exit
    _

</llo_original>
